<compile_context>
chip_gen: v7x
topology: tpu7x:2x2x1
jax: 0.10.0
libtpu: 0.0.40
codegen_flags: <defaults>
</compile_context>

<pallas_src>
import jax
import jax.numpy as jnp
from jax.experimental import pallas as pl
from jax.experimental.pallas import tpu as pltpu  # noqa: F401  (TPU backend assumed)

B, S, H = 2, 8, 128          # batch, seq, hidden (H chosen lane-dense: multiple of 128)
N = B * S                    # tokens
VOCAB = 512


# ---------------------------------------------------------------------------
# Fused kernel: encoder stub -> CLS pooler -> RegressionHead -> MSE loss
# ---------------------------------------------------------------------------
def regression_fused_kernel(
    emb_ref,                   # [N, H] f32  word + pos + seg embeddings
    sel_ref,                   # [B, N] f32  CLS-row selection matrix (1.0 at column b*S)
    enc_w_ref, enc_b_ref,      # [H, H], [1, H]  encoder stub dense
    pool_w_ref, pool_b_ref,    # [H, H], [1, H]  BERT pooler dense
    dense_w_ref, dense_b_ref,  # [H, H], [1, H]  RegressionHead.dense
    out_w_ref, out_b_ref,      # [1, H], [1, 1]  RegressionHead.out_proj (row layout)
    label_ref,                 # [1, B] f32  regression targets (lane-dense)
    logits_ref,                # [1, B] f32  OUT: scores, B on the lane axis
    loss_ref,                  # [1, 1] f32  OUT: MSE loss
):
    f32, bf16 = jnp.float32, jnp.bfloat16

    # ---- Encoder stub: per-token dense + tanh -> unpooled [N, H] -------------------
    # TODO(synk): the real encoder is an external transformer (self-attention consumes
    # input_mask); it is stubbed as a single dense+tanh layer over the embeddings.
    h = jnp.dot(emb_ref[...].astype(bf16), enc_w_ref[...].astype(bf16),
                preferred_element_type=f32) + enc_b_ref[...]
    unpooled = jnp.tanh(h)                                                  # [N, H] f32

    # ---- BERT pooler: pick each sequence's CLS row via a selection matmul (exact in
    # f32: rows are 1.0/0.0), then dense + tanh -> pooled [B, H] ---------------------
    cls = jnp.dot(sel_ref[...], unpooled, preferred_element_type=f32)       # [B, H]
    pooled = jnp.tanh(
        jnp.dot(cls.astype(bf16), pool_w_ref[...].astype(bf16),
                preferred_element_type=f32) + pool_b_ref[...])              # [B, H]

    # ---- RegressionHead: dropout(eval = identity) -> dense -> tanh -> dropout ->
    #      out_proj.  TODO(synk): nn.Dropout is identity in eval mode.
    x = jnp.tanh(
        jnp.dot(pooled.astype(bf16), dense_w_ref[...].astype(bf16),
                preferred_element_type=f32) + dense_b_ref[...])             # [B, H]

    # out_proj computed lane-dense: scores[0, b] = sum_h out_w[0, h] * x[b, h] + bias
    scores = jnp.dot(out_w_ref[...], x.T,
                     preferred_element_type=f32) + out_b_ref[...]           # [1, B]
    logits_ref[...] = scores

    # ---- nn.MSELoss()(logits.view(-1), label.view(-1)), mean reduction -------------
    diff = scores - label_ref[...]                                          # [1, B]
    loss_ref[...] = jnp.sum(diff * diff, axis=-1, keepdims=True) * (
        1.0 / label_ref.shape[-1])                                          # [1, 1]


# ---------------------------------------------------------------------------
# RegressionModel.forward equivalent (compute_loss=True path)
# ---------------------------------------------------------------------------
def regression_model_forward(params, input_ids, segment_ids, input_mask, label):
    # Embedding lookup (gather) is data prep and stays in JAX.
    # TODO(synk): input_mask is only consumed by the real transformer's attention; the
    # stub encoder has no attention, so it is unused here.
    del input_mask
    emb = (params["word_emb"][input_ids]
           + params["pos_emb"][None, :S, :]
           + params["seg_emb"][segment_ids]).reshape(N, H).astype(jnp.float32)

    # CLS-selection matrix (constant, folded by jit): sel[b, b*S] = 1.0
    sel = jnp.zeros((B, N), jnp.float32).at[jnp.arange(B), jnp.arange(B) * S].set(1.0)

    logits_row, loss = pl.pallas_call(
        regression_fused_kernel,
        out_shape=(
            jax.ShapeDtypeStruct((1, B), jnp.float32),   # lane-dense logits
            jax.ShapeDtypeStruct((1, 1), jnp.float32),   # scalar MSE loss
        ),
    )(emb, sel,
      params["enc_w"], params["enc_b"],
      params["pool_w"], params["pool_b"],
      params["dense_w"], params["dense_b"],
      params["out_w"], params["out_b"],
      label.reshape(1, B).astype(jnp.float32))

    return logits_row.reshape(B, 1), loss[0, 0]


# ---------------------------------------------------------------------------
# Pure-JAX reference (f32 end to end)
# ---------------------------------------------------------------------------
def _reference(params, input_ids, segment_ids, label):
    emb = (params["word_emb"][input_ids]
           + params["pos_emb"][None, :S, :]
           + params["seg_emb"][segment_ids]).reshape(N, H)
    unpooled = jnp.tanh(emb @ params["enc_w"] + params["enc_b"])
    cls = unpooled.reshape(B, S, H)[:, 0, :]
    pooled = jnp.tanh(cls @ params["pool_w"] + params["pool_b"])
    x = jnp.tanh(pooled @ params["dense_w"] + params["dense_b"])
    logits = x @ params["out_w"].T + params["out_b"]                        # [B, 1]
    loss = jnp.mean((logits.reshape(-1) - label.reshape(-1)) ** 2)
    return logits, loss


if __name__ == "__main__":
    key = jax.random.PRNGKey(0)
    ks = jax.random.split(key, 12)
    params = {
        "word_emb": 0.5 * jax.random.normal(ks[0], (VOCAB, H), jnp.float32),
        "pos_emb":  0.5 * jax.random.normal(ks[1], (S, H), jnp.float32),
        "seg_emb":  0.5 * jax.random.normal(ks[2], (2, H), jnp.float32),
        "enc_w":    0.1 * jax.random.normal(ks[3], (H, H), jnp.float32),
        "enc_b":    jnp.zeros((1, H), jnp.float32),
        "pool_w":   0.1 * jax.random.normal(ks[4], (H, H), jnp.float32),
        "pool_b":   jnp.zeros((1, H), jnp.float32),
        "dense_w":  0.1 * jax.random.normal(ks[5], (H, H), jnp.float32),
        "dense_b":  jnp.zeros((1, H), jnp.float32),
        "out_w":    0.1 * jax.random.normal(ks[6], (1, H), jnp.float32),
        "out_b":    jnp.zeros((1, 1), jnp.float32),
    }

    input_ids = jax.random.randint(ks[7], (B, S), 0, VOCAB, jnp.int32)
    segment_ids = jnp.zeros((B, S), jnp.int32)
    input_mask = jnp.ones((B, S), jnp.int32)
    label = jax.random.normal(ks[8], (B,), jnp.float32)   # regression targets

    logits, loss = jax.jit(regression_model_forward)(
        params, input_ids, segment_ids, input_mask, label)
    jax.block_until_ready((logits, loss))

    ref_logits, ref_loss = _reference(params, input_ids, segment_ids, label)
    assert logits.shape == (B, 1) and loss.shape == ()
    assert jnp.allclose(logits, ref_logits, atol=5e-2, rtol=5e-2)
    assert jnp.allclose(loss, ref_loss, atol=5e-2, rtol=5e-2)
    print("KERNEL_OK")
</pallas_src>

<mosaic_0001>
module attributes {stable_mosaic.version = 11 : i64} {
  func.func @regression_fused_kernel(%arg0: memref<16x128xf32, #tpu.memory_space<vmem>>, %arg1: memref<2x16xf32, #tpu.memory_space<vmem>>, %arg2: memref<128x128xf32, #tpu.memory_space<vmem>>, %arg3: memref<1x128xf32, #tpu.memory_space<vmem>>, %arg4: memref<128x128xf32, #tpu.memory_space<vmem>>, %arg5: memref<1x128xf32, #tpu.memory_space<vmem>>, %arg6: memref<128x128xf32, #tpu.memory_space<vmem>>, %arg7: memref<1x128xf32, #tpu.memory_space<vmem>>, %arg8: memref<1x128xf32, #tpu.memory_space<vmem>>, %arg9: memref<1x1xf32, #tpu.memory_space<vmem>>, %arg10: memref<1x2xf32, #tpu.memory_space<vmem>>, %arg11: memref<1x2xf32, #tpu.memory_space<vmem>>, %arg12: memref<1x1xf32, #tpu.memory_space<vmem>>) attributes {dimension_semantics = [], scalar_prefetch = 0 : i64, scratch_operands = 0 : i64, tpu.core_type = #tpu.core_type<tc>} {
    %c0 = arith.constant 0 : index
    %c0_0 = arith.constant 0 : index
    %0 = vector.load %arg0[%c0, %c0_0] : memref<16x128xf32, #tpu.memory_space<vmem>>, vector<16x128xf32>
    %1 = arith.truncf %0 : vector<16x128xf32> to vector<16x128xbf16>
    %c0_1 = arith.constant 0 : index
    %c0_2 = arith.constant 0 : index
    %2 = vector.load %arg2[%c0_1, %c0_2] : memref<128x128xf32, #tpu.memory_space<vmem>>, vector<128x128xf32>
    %3 = arith.truncf %2 : vector<128x128xf32> to vector<128x128xbf16>
    %cst = arith.constant dense<0.000000e+00> : vector<16x128xf32>
    %4 = tpu.matmul %1, %3, %cst {dimension_numbers = #tpu.dot_dimension_numbers<[1], [0], [0], [1], [0, 0, 1, 1], [], []>} : vector<16x128xbf16>, vector<128x128xbf16>, vector<16x128xf32> -> vector<16x128xf32>
    %c0_3 = arith.constant 0 : index
    %c0_4 = arith.constant 0 : index
    %5 = vector.load %arg3[%c0_3, %c0_4] : memref<1x128xf32, #tpu.memory_space<vmem>>, vector<1x128xf32>
    %6 = vector.broadcast %5 : vector<1x128xf32> to vector<16x128xf32>
    %7 = arith.addf %4, %6 : vector<16x128xf32>
    %8 = math.tanh %7 : vector<16x128xf32>
    %c0_5 = arith.constant 0 : index
    %c0_6 = arith.constant 0 : index
    %9 = vector.load %arg1[%c0_5, %c0_6] : memref<2x16xf32, #tpu.memory_space<vmem>>, vector<2x16xf32>
    %cst_7 = arith.constant dense<0.000000e+00> : vector<2x128xf32>
    %10 = tpu.matmul %9, %8, %cst_7 {dimension_numbers = #tpu.dot_dimension_numbers<[1], [0], [0], [1], [0, 0, 1, 1], [], []>} : vector<2x16xf32>, vector<16x128xf32>, vector<2x128xf32> -> vector<2x128xf32>
    %11 = arith.truncf %10 : vector<2x128xf32> to vector<2x128xbf16>
    %c0_8 = arith.constant 0 : index
    %c0_9 = arith.constant 0 : index
    %12 = vector.load %arg4[%c0_8, %c0_9] : memref<128x128xf32, #tpu.memory_space<vmem>>, vector<128x128xf32>
    %13 = arith.truncf %12 : vector<128x128xf32> to vector<128x128xbf16>
    %cst_10 = arith.constant dense<0.000000e+00> : vector<2x128xf32>
    %14 = tpu.matmul %11, %13, %cst_10 {dimension_numbers = #tpu.dot_dimension_numbers<[1], [0], [0], [1], [0, 0, 1, 1], [], []>} : vector<2x128xbf16>, vector<128x128xbf16>, vector<2x128xf32> -> vector<2x128xf32>
    %c0_11 = arith.constant 0 : index
    %c0_12 = arith.constant 0 : index
    %15 = vector.load %arg5[%c0_11, %c0_12] : memref<1x128xf32, #tpu.memory_space<vmem>>, vector<1x128xf32>
    %16 = vector.broadcast %15 : vector<1x128xf32> to vector<2x128xf32>
    %17 = arith.addf %14, %16 : vector<2x128xf32>
    %18 = math.tanh %17 : vector<2x128xf32>
    %19 = arith.truncf %18 : vector<2x128xf32> to vector<2x128xbf16>
    %c0_13 = arith.constant 0 : index
    %c0_14 = arith.constant 0 : index
    %20 = vector.load %arg6[%c0_13, %c0_14] : memref<128x128xf32, #tpu.memory_space<vmem>>, vector<128x128xf32>
    %21 = arith.truncf %20 : vector<128x128xf32> to vector<128x128xbf16>
    %cst_15 = arith.constant dense<0.000000e+00> : vector<2x128xf32>
    %22 = tpu.matmul %19, %21, %cst_15 {dimension_numbers = #tpu.dot_dimension_numbers<[1], [0], [0], [1], [0, 0, 1, 1], [], []>} : vector<2x128xbf16>, vector<128x128xbf16>, vector<2x128xf32> -> vector<2x128xf32>
    %c0_16 = arith.constant 0 : index
    %c0_17 = arith.constant 0 : index
    %23 = vector.load %arg7[%c0_16, %c0_17] : memref<1x128xf32, #tpu.memory_space<vmem>>, vector<1x128xf32>
    %24 = vector.broadcast %23 : vector<1x128xf32> to vector<2x128xf32>
    %25 = arith.addf %22, %24 : vector<2x128xf32>
    %26 = math.tanh %25 : vector<2x128xf32>
    %c0_18 = arith.constant 0 : index
    %c0_19 = arith.constant 0 : index
    %27 = vector.load %arg8[%c0_18, %c0_19] : memref<1x128xf32, #tpu.memory_space<vmem>>, vector<1x128xf32>
    %28 = tpu.transpose %26, [1, 0] : vector<2x128xf32> -> vector<128x2xf32>
    %cst_20 = arith.constant dense<0.000000e+00> : vector<1x2xf32>
    %29 = tpu.matmul %27, %28, %cst_20 {dimension_numbers = #tpu.dot_dimension_numbers<[1], [0], [0], [1], [0, 0, 1, 1], [], []>} : vector<1x128xf32>, vector<128x2xf32>, vector<1x2xf32> -> vector<1x2xf32>
    %c0_21 = arith.constant 0 : index
    %c0_22 = arith.constant 0 : index
    %30 = vector.load %arg9[%c0_21, %c0_22] : memref<1x1xf32, #tpu.memory_space<vmem>>, vector<1x1xf32>
    %31 = vector.broadcast %30 : vector<1x1xf32> to vector<1x2xf32>
    %32 = arith.addf %29, %31 : vector<1x2xf32>
    %c0_23 = arith.constant 0 : index
    %c0_24 = arith.constant 0 : index
    %33 = vector.load %arg11[%c0_23, %c0_24] : memref<1x2xf32, #tpu.memory_space<vmem>>, vector<1x2xf32>
    tpu.vector_store %arg11[%c0_23, %c0_24], %32 {strides = array<i32>} : memref<1x2xf32, #tpu.memory_space<vmem>>, vector<1x2xf32>,
    %c0_25 = arith.constant 0 : index
    %c0_26 = arith.constant 0 : index
    %34 = vector.load %arg10[%c0_25, %c0_26] : memref<1x2xf32, #tpu.memory_space<vmem>>, vector<1x2xf32>
    %35 = arith.subf %32, %34 : vector<1x2xf32>
    %36 = arith.mulf %35, %35 : vector<1x2xf32>
    %cst_27 = arith.constant dense<0.000000e+00> : vector<1xf32>
    %37 = vector.multi_reduction <add>, %36, %cst_27 [1] : vector<1x2xf32> to vector<1xf32>
    %38 = vector.shape_cast %37 : vector<1xf32> to vector<1x1xf32>
    %cst_28 = arith.constant 5.000000e-01 : f32
    %39 = vector.broadcast %cst_28 : f32 to vector<1x1xf32>
    %40 = arith.mulf %38, %39 : vector<1x1xf32>
    %c0_29 = arith.constant 0 : index
    %c0_30 = arith.constant 0 : index
    %41 = vector.load %arg12[%c0_29, %c0_30] : memref<1x1xf32, #tpu.memory_space<vmem>>, vector<1x1xf32>
    tpu.vector_store %arg12[%c0_29, %c0_30], %40 {strides = array<i32>} : memref<1x1xf32, #tpu.memory_space<vmem>>, vector<1x1xf32>,
    return
  }
}

</mosaic_0001>

<llo_original>
// kernel: regression_model_forward.1
$region0: #{regression_model_forward.1}
  #allocation0 [shape = 'u32[]', space=smem, size = 0x4, offset = 0x4, fixed_abs, tag = 'smem constant byte address 0x4 - core index']
  #allocation1 [shape = 'u32[144,128]{1,0:T(1,128)}', space=vmem, size = 0x12000, scoped, tag = 'internal scratch']
  #allocation2 [shape = 'f32[1,1]{1,0:T(1,128)S(1)}', space=vmem, size = 0x200, scoped, tag = 'scoped memory for regression_model_forward.1']
  %s0 = inlined_call_operand.vmem [shape: f32[16,128], index: 0, kind: input, shape index: {}]
  %s1 = inlined_call_operand.vmem [shape: f32[2,16], index: 1, kind: input, shape index: {}]
  %s2 = inlined_call_operand.vmem [shape: f32[128,128], index: 2, kind: input, shape index: {}]
  %s3 = inlined_call_operand.vmem [shape: f32[1,128], index: 3, kind: input, shape index: {}]
  %s4 = inlined_call_operand.vmem [shape: f32[128,128], index: 4, kind: input, shape index: {}]
  %s5 = inlined_call_operand.vmem [shape: f32[1,128], index: 5, kind: input, shape index: {}]
  %s6 = inlined_call_operand.vmem [shape: f32[128,128], index: 6, kind: input, shape index: {}]
  %s7 = inlined_call_operand.vmem [shape: f32[1,128], index: 7, kind: input, shape index: {}]
  %s8 = inlined_call_operand.vmem [shape: f32[1,128], index: 8, kind: input, shape index: {}]
  %s9 = inlined_call_operand.<no memory space> [shape: f32[1,1], index: 9, kind: input, shape index: {}]
  %s10 = inlined_call_operand.vmem [shape: f32[1,2], index: 10, kind: input, shape index: {}]
  %s11 = inlined_call_operand.hbm [shape: f32[1,2], index: 11, kind: output, shape index: {0}]
  %s12 = inlined_call_operand.hbm [shape: f32[1,1], index: 12, kind: output, shape index: {1}]
  %13 = xla_tuple %s11, %s12
  %s14 = sld [smem:[#allocation0]]
  $region62: #{regression_model_forward.1} parent=0
    _
  %s16 = ssub.s32 1, %s14
  %s17 = scalar_select 0, %s16, %s14
  %v18 = vstv %s9
  %19 = vst [vmem:[#allocation2] sm:$0x1] %v18
  $region1: #{regression_model_forward.1} parent=0
    #allocation3 [shape = 'u8[512]{0}', space=vmem, size = 0x400, scoped, tag = 'output window, operand 0, single buffered']
    #allocation4 [shape = 's32[1]{0}', space=sflag, size = 0x4, scoped, tag = 'scoped memory for regression_model_forward.1']
    #allocation5 [shape = 'u8[512]{0}', space=vmem, size = 0x400, scoped, tag = 'output window, operand 1, single buffered']
    #allocation6 [shape = 's32[1]{0}', space=sflag, size = 0x4, scoped, tag = 'scoped memory for regression_model_forward.1']
    %20 = vsyncpa [#allocation4], 0
    %21 = vsyncpa [#allocation6], 0
    // Predicated region
    $region2: #{regression_model_forward.1} parent=1 // pred_check
      _
    $region3: #{regression_model_forward.1} parent=1 // pred_check_branch
      %23 = sbr.rel (0) target = $region5
    $region4: #{regression_model_forward.1} parent=1 // pred_region
      _
    $region5: #{regression_model_forward.1} parent=1 // pred_fallthru
      _
    // Predicated region
    $region6: #{regression_model_forward.1} parent=1 // pred_check
      _
    $region7: #{regression_model_forward.1} parent=1 // pred_check_branch
      %25 = sbr.rel (0) target = $region9
    $region8: #{regression_model_forward.1} parent=1 // pred_region
      _
    $region9: #{regression_model_forward.1} parent=1 // pred_fallthru
      _
    // Predicated region
    $region10: #{regression_model_forward.1} parent=1 // pred_check
      _
    $region11: #{regression_model_forward.1} parent=1 // pred_check_branch
      %27 = sbr.rel (0) target = $region13
    $region12: #{regression_model_forward.1} parent=1 // pred_region
      _
    $region13: #{regression_model_forward.1} parent=1 // pred_fallthru
      _
    // Predicated region
    $region14: #{regression_model_forward.1} parent=1 // pred_check
      _
    $region15: #{regression_model_forward.1} parent=1 // pred_check_branch
      %29 = sbr.rel (0) target = $region17
    $region16: #{regression_model_forward.1} parent=1 // pred_region
      _
    $region17: #{regression_model_forward.1} parent=1 // pred_fallthru
      _
    // Predicated region
    $region18: #{regression_model_forward.1} parent=1 // pred_check
      _
    $region19: #{regression_model_forward.1} parent=1 // pred_check_branch
      %31 = sbr.rel (0) target = $region21
    $region20: #{regression_model_forward.1} parent=1 // pred_region
      _
    $region21: #{regression_model_forward.1} parent=1 // pred_fallthru
      _
    // Predicated region
    $region22: #{regression_model_forward.1} parent=1 // pred_check
      _
    $region23: #{regression_model_forward.1} parent=1 // pred_check_branch
      %33 = sbr.rel (0) target = $region25
    $region24: #{regression_model_forward.1} parent=1 // pred_region
      _
    $region25: #{regression_model_forward.1} parent=1 // pred_fallthru
      _
    // Predicated region
    $region26: #{regression_model_forward.1} parent=1 // pred_check
      _
    $region27: #{regression_model_forward.1} parent=1 // pred_check_branch
      %35 = sbr.rel (0) target = $region29
    $region28: #{regression_model_forward.1} parent=1 // pred_region
      _
    $region29: #{regression_model_forward.1} parent=1 // pred_fallthru
      _
    // Predicated region
    $region30: #{regression_model_forward.1} parent=1 // pred_check
      _
    $region31: #{regression_model_forward.1} parent=1 // pred_check_branch
      %37 = sbr.rel (0) target = $region33
    $region32: #{regression_model_forward.1} parent=1 // pred_region
      _
    $region33: #{regression_model_forward.1} parent=1 // pred_fallthru
      _
    // Predicated region
    $region34: #{regression_model_forward.1} parent=1 // pred_check
      _
    $region35: #{regression_model_forward.1} parent=1 // pred_check_branch
      %39 = sbr.rel (0) target = $region37
    $region36: #{regression_model_forward.1} parent=1 // pred_region
      _
    $region37: #{regression_model_forward.1} parent=1 // pred_fallthru
      _
    // Predicated region
    $region38: #{regression_model_forward.1} parent=1 // pred_check
      _
    $region39: #{regression_model_forward.1} parent=1 // pred_check_branch
      %41 = sbr.rel (0) target = $region41
    $region40: #{regression_model_forward.1} parent=1 // pred_region
      _
    $region41: #{regression_model_forward.1} parent=1 // pred_fallthru
      _
    // Predicated region
    $region42: #{regression_model_forward.1} parent=1 // pred_check
      _
    $region43: #{regression_model_forward.1} parent=1 // pred_check_branch
      %43 = sbr.rel (0) target = $region45
    $region44: #{regression_model_forward.1} parent=1 // pred_region
      _
    $region45: #{regression_model_forward.1} parent=1 // pred_fallthru
      _
    %v45 = vld [vmem:[%s0] sm:$0xff]
    %v46 = vld [vmem:[%s0 + $0x8] sm:$0xff]
    %v47 = vpack.c.bf16 %v46, %v45
    %v48 = vld [vmem:[%s2] sm:$0xff]
    %v49 = vld [vmem:[%s2 + $0x8] sm:$0xff]
    %v50 = vld [vmem:[%s2 + $0x10] sm:$0xff]
    %v51 = vld [vmem:[%s2 + $0x18] sm:$0xff]
    %v52 = vld [vmem:[%s2 + $0x20] sm:$0xff]
    %v53 = vld [vmem:[%s2 + $0x28] sm:$0xff]
    %v54 = vld [vmem:[%s2 + $0x30] sm:$0xff]
    %v55 = vld [vmem:[%s2 + $0x38] sm:$0xff]
    %v56 = vld [vmem:[%s2 + $0x40] sm:$0xff]
    %v57 = vld [vmem:[%s2 + $0x48] sm:$0xff]
    %v58 = vld [vmem:[%s2 + $0x50] sm:$0xff]
    %v59 = vld [vmem:[%s2 + $0x58] sm:$0xff]
    %v60 = vld [vmem:[%s2 + $0x60] sm:$0xff]
    %v61 = vld [vmem:[%s2 + $0x68] sm:$0xff]
    %v62 = vld [vmem:[%s2 + $0x70] sm:$0xff]
    %v63 = vld [vmem:[%s2 + $0x78] sm:$0xff]
    %v64 = vpack.c.bf16 %v49, %v48
    %v65 = vpack.c.bf16 %v51, %v50
    %v66 = vpack.c.bf16 %v53, %v52
    %v67 = vpack.c.bf16 %v55, %v54
    %v68 = vpack.c.bf16 %v57, %v56
    %v69 = vpack.c.bf16 %v59, %v58
    %v70 = vpack.c.bf16 %v61, %v60
    %v71 = vpack.c.bf16 %v63, %v62
    %v72 = vld [vmem:[%s3] sm:$0x1]
    %v74 = vlaneseq
    %v75 = vshrl.u32 %v74, 7
    %v76 = vsub.s32 0, %v75
    %v77 = vrot.slane %v72, %v76
    %79 = vmatprep.subr.bf16.mxu0 0
    %80 = vmatpush1.bf16.msra.mxu0 %v64
    %81 = vmatprep.subr.bf16.mxu0 0
    %82 = vmatpush1.bf16.msra.mxu0 %v65
    %83 = vmatprep.subr.bf16.mxu0 0
    %84 = vmatpush1.bf16.msra.mxu0 %v66
    %85 = vmatprep.subr.bf16.mxu0 0
    %86 = vmatpush1.bf16.msra.mxu0 %v67
    %87 = vmatprep.subr.bf16.mxu0 0
    %88 = vmatpush1.bf16.msra.mxu0 %v68
    %89 = vmatprep.subr.bf16.mxu0 0
    %90 = vmatpush1.bf16.msra.mxu0 %v69
    %91 = vmatprep.subr.bf16.mxu0 0
    %92 = vmatpush1.bf16.msra.mxu0 %v70
    %93 = vmatprep.subr.bf16.mxu0 0
    %94 = vmatpush1.bf16.msra.mxu0 %v71
    %95 = vmatprep.subr.bf16.mxu0 0
    %96 = vmatpush1.bf16.msra.mxu0 0
    %97 = vmatprep.subr.bf16.mxu0 0
    %98 = vmatpush1.bf16.msra.mxu0 0
    %99 = vmatprep.subr.bf16.mxu0 0
    %100 = vmatpush1.bf16.msra.mxu0 0
    %101 = vmatprep.subr.bf16.mxu0 0
    %102 = vmatpush1.bf16.msra.mxu0 0
    %103 = vmatprep.subr.bf16.mxu0 0
    %104 = vmatpush1.bf16.msra.mxu0 0
    %105 = vmatprep.subr.bf16.mxu0 0
    %106 = vmatpush1.bf16.msra.mxu0 0
    %107 = vmatprep.subr.bf16.mxu0 0
    %108 = vmatpush1.bf16.msra.mxu0 0
    %109 = vmatprep.subr.bf16.mxu0 0
    %110 = vmatpush1.bf16.msra.mxu0 0
    %111 = vmatprep.mubr.bf16.mxu0 0
    %112 = vmatmul.mubr.bf16.gmra.mrb[0].mxu0 %v47
    %v113 = vpop.f32.mrb[0].mxu0
    %v114 = vadd.f32 %v77, %v113
    %v115 = vpop.f32.mrb[0].mxu0
    %v116 = vpop.f32.mrb[0].mxu0
    %v117 = vadd.f32 %v77, %v116
    %v118 = vpop.f32.mrb[0].mxu0
    %119 = vdwg.mxu0
    %v120 = vtanh.pop %v114
    %v121 = vtanh.pop %v117
    %v122 = vld [vmem:[%s1] sm:$0x3]
    %vm123 = vcmask 130048
    %v125 = vsel %vm123, %v122, 0
    %127 = vmatprep.subr.mxu0 0.0
    %128 = vmatpush1.msra.mxu0 %v120
    %129 = vmatprep.subr.mxu0 0.0
    %130 = vmatpush1.msra.mxu0 %v121
    %131 = vmatprep.subr.mxu0 0.0
    %132 = vmatpush1.msra.mxu0 0.0
    %133 = vmatprep.subr.mxu0 0.0
    %134 = vmatpush1.msra.mxu0 0.0
    %135 = vmatprep.subr.mxu0 0.0
    %136 = vmatpush1.msra.mxu0 0.0
    %137 = vmatprep.subr.mxu0 0.0
    %138 = vmatpush1.msra.mxu0 0.0
    %139 = vmatprep.subr.mxu0 0.0
    %140 = vmatpush1.msra.mxu0 0.0
    %141 = vmatprep.subr.mxu0 0.0
    %142 = vmatpush1.msra.mxu0 0.0
    %143 = vmatprep.subr.mxu0 0.0
    %144 = vmatpush1.msra.mxu0 0.0
    %145 = vmatprep.subr.mxu0 0.0
    %146 = vmatpush1.msra.mxu0 0.0
    %147 = vmatprep.subr.mxu0 0.0
    %148 = vmatpush1.msra.mxu0 0.0
    %149 = vmatprep.subr.mxu0 0.0
    %150 = vmatpush1.msra.mxu0 0.0
    %151 = vmatprep.subr.mxu0 0.0
    %152 = vmatpush1.msra.mxu0 0.0
    %153 = vmatprep.subr.mxu0 0.0
    %154 = vmatpush1.msra.mxu0 0.0
    %155 = vmatprep.subr.mxu0 0.0
    %156 = vmatpush1.msra.mxu0 0.0
    %157 = vmatprep.subr.mxu0 0.0
    %158 = vmatpush1.msra.mxu0 0.0
    %159 = vmatprep.subr.mxu0 0.0
    %160 = vmatpush1.msra.mxu0 0.0
    %161 = vmatprep.subr.mxu0 0.0
    %162 = vmatpush1.msra.mxu0 0.0
    %163 = vmatprep.subr.mxu0 0.0
    %164 = vmatpush1.msra.mxu0 0.0
    %165 = vmatprep.subr.mxu0 0.0
    %166 = vmatpush1.msra.mxu0 0.0
    %167 = vmatprep.subr.mxu0 0.0
    %168 = vmatpush1.msra.mxu0 0.0
    %169 = vmatprep.subr.mxu0 0.0
    %170 = vmatpush1.msra.mxu0 0.0
    %171 = vmatprep.subr.mxu0 0.0
    %172 = vmatpush1.msra.mxu0 0.0
    %173 = vmatprep.subr.mxu0 0.0
    %174 = vmatpush1.msra.mxu0 0.0
    %175 = vmatprep.subr.mxu0 0.0
    %176 = vmatpush1.msra.mxu0 0.0
    %177 = vmatprep.subr.mxu0 0.0
    %178 = vmatpush1.msra.mxu0 0.0
    %179 = vmatprep.subr.mxu0 0.0
    %180 = vmatpush1.msra.mxu0 0.0
    %181 = vmatprep.subr.mxu0 0.0
    %182 = vmatpush1.msra.mxu0 0.0
    %183 = vmatprep.subr.mxu0 0.0
    %184 = vmatpush1.msra.mxu0 0.0
    %185 = vmatprep.subr.mxu0 0.0
    %186 = vmatpush1.msra.mxu0 0.0
    %187 = vmatprep.subr.mxu0 0.0
    %188 = vmatpush1.msra.mxu0 0.0
    %189 = vmatprep.subr.mxu0 0.0
    %190 = vmatpush1.msra.mxu0 0.0
    %191 = vmatprep.mubr.f32.mxu0 0.0
    %192 = vmatmul.mubr.f32.gmra.mrb[0].mxu0 %v125
    %v193 = vpop.f32.mrb[0].mxu0
    %v194 = vadd.f32 0.0, %v193
    %v195 = vpop.f32.mrb[0].mxu0
    %196 = vdwg.mxu0
    %v197 = vpack.c.bf16 %v194, %v194
    %v198 = vld [vmem:[%s4] sm:$0xff]
    %v199 = vld [vmem:[%s4 + $0x8] sm:$0xff]
    %v200 = vld [vmem:[%s4 + $0x10] sm:$0xff]
    %v201 = vld [vmem:[%s4 + $0x18] sm:$0xff]
    %v202 = vld [vmem:[%s4 + $0x20] sm:$0xff]
    %v203 = vld [vmem:[%s4 + $0x28] sm:$0xff]
    %v204 = vld [vmem:[%s4 + $0x30] sm:$0xff]
    %v205 = vld [vmem:[%s4 + $0x38] sm:$0xff]
    %v206 = vld [vmem:[%s4 + $0x40] sm:$0xff]
    %v207 = vld [vmem:[%s4 + $0x48] sm:$0xff]
    %v208 = vld [vmem:[%s4 + $0x50] sm:$0xff]
    %v209 = vld [vmem:[%s4 + $0x58] sm:$0xff]
    %v210 = vld [vmem:[%s4 + $0x60] sm:$0xff]
    %v211 = vld [vmem:[%s4 + $0x68] sm:$0xff]
    %v212 = vld [vmem:[%s4 + $0x70] sm:$0xff]
    %v213 = vld [vmem:[%s4 + $0x78] sm:$0xff]
    %v214 = vpack.c.bf16 %v199, %v198
    %v215 = vpack.c.bf16 %v201, %v200
    %v216 = vpack.c.bf16 %v203, %v202
    %v217 = vpack.c.bf16 %v205, %v204
    %v218 = vpack.c.bf16 %v207, %v206
    %v219 = vpack.c.bf16 %v209, %v208
    %v220 = vpack.c.bf16 %v211, %v210
    %v221 = vpack.c.bf16 %v213, %v212
    %v222 = vld [vmem:[%s5] sm:$0x1]
    %v224 = vlaneseq
    %v225 = vshrl.u32 %v224, 7
    %v226 = vsub.s32 0, %v225
    %v227 = vrot.slane %v222, %v226
    %229 = vmatprep.subr.bf16.mxu0 0
    %230 = vmatpush1.bf16.msra.mxu0 %v214
    %231 = vmatprep.subr.bf16.mxu0 0
    %232 = vmatpush1.bf16.msra.mxu0 %v215
    %233 = vmatprep.subr.bf16.mxu0 0
    %234 = vmatpush1.bf16.msra.mxu0 %v216
    %235 = vmatprep.subr.bf16.mxu0 0
    %236 = vmatpush1.bf16.msra.mxu0 %v217
    %237 = vmatprep.subr.bf16.mxu0 0
    %238 = vmatpush1.bf16.msra.mxu0 %v218
    %239 = vmatprep.subr.bf16.mxu0 0
    %240 = vmatpush1.bf16.msra.mxu0 %v219
    %241 = vmatprep.subr.bf16.mxu0 0
    %242 = vmatpush1.bf16.msra.mxu0 %v220
    %243 = vmatprep.subr.bf16.mxu0 0
    %244 = vmatpush1.bf16.msra.mxu0 %v221
    %245 = vmatprep.subr.bf16.mxu0 0
    %246 = vmatpush1.bf16.msra.mxu0 0
    %247 = vmatprep.subr.bf16.mxu0 0
    %248 = vmatpush1.bf16.msra.mxu0 0
    %249 = vmatprep.subr.bf16.mxu0 0
    %250 = vmatpush1.bf16.msra.mxu0 0
    %251 = vmatprep.subr.bf16.mxu0 0
    %252 = vmatpush1.bf16.msra.mxu0 0
    %253 = vmatprep.subr.bf16.mxu0 0
    %254 = vmatpush1.bf16.msra.mxu0 0
    %255 = vmatprep.subr.bf16.mxu0 0
    %256 = vmatpush1.bf16.msra.mxu0 0
    %257 = vmatprep.subr.bf16.mxu0 0
    %258 = vmatpush1.bf16.msra.mxu0 0
    %259 = vmatprep.subr.bf16.mxu0 0
    %260 = vmatpush1.bf16.msra.mxu0 0
    %261 = vmatprep.mubr.bf16.mxu0 0
    %262 = vmatmul.mubr.bf16.gmra.mrb[0].mxu0 %v197
    %v263 = vpop.f32.mrb[0].mxu0
    %v264 = vadd.f32 %v227, %v263
    %v265 = vpop.f32.mrb[0].mxu0
    %v266 = vpop.f32.mrb[0].mxu0
    %v267 = vpop.f32.mrb[0].mxu0
    %268 = vdwg.mxu0
    %v269 = vtanh.pop %v264
    %v270 = vpack.c.bf16 %v269, %v269
    %v271 = vld [vmem:[%s6] sm:$0xff]
    %v272 = vld [vmem:[%s6 + $0x8] sm:$0xff]
    %v273 = vld [vmem:[%s6 + $0x10] sm:$0xff]
    %v274 = vld [vmem:[%s6 + $0x18] sm:$0xff]
    %v275 = vld [vmem:[%s6 + $0x20] sm:$0xff]
    %v276 = vld [vmem:[%s6 + $0x28] sm:$0xff]
    %v277 = vld [vmem:[%s6 + $0x30] sm:$0xff]
    %v278 = vld [vmem:[%s6 + $0x38] sm:$0xff]
    %v279 = vld [vmem:[%s6 + $0x40] sm:$0xff]
    %v280 = vld [vmem:[%s6 + $0x48] sm:$0xff]
    %v281 = vld [vmem:[%s6 + $0x50] sm:$0xff]
    %v282 = vld [vmem:[%s6 + $0x58] sm:$0xff]
    %v283 = vld [vmem:[%s6 + $0x60] sm:$0xff]
    %v284 = vld [vmem:[%s6 + $0x68] sm:$0xff]
    %v285 = vld [vmem:[%s6 + $0x70] sm:$0xff]
    %v286 = vld [vmem:[%s6 + $0x78] sm:$0xff]
    %v287 = vpack.c.bf16 %v272, %v271
    %v288 = vpack.c.bf16 %v274, %v273
    %v289 = vpack.c.bf16 %v276, %v275
    %v290 = vpack.c.bf16 %v278, %v277
    %v291 = vpack.c.bf16 %v280, %v279
    %v292 = vpack.c.bf16 %v282, %v281
    %v293 = vpack.c.bf16 %v284, %v283
    %v294 = vpack.c.bf16 %v286, %v285
    %v295 = vld [vmem:[%s7] sm:$0x1]
    %v297 = vlaneseq
    %v298 = vshrl.u32 %v297, 7
    %v299 = vsub.s32 0, %v298
    %v300 = vrot.slane %v295, %v299
    %302 = vmatprep.subr.bf16.mxu0 0
    %303 = vmatpush1.bf16.msra.mxu0 %v287
    %304 = vmatprep.subr.bf16.mxu0 0
    %305 = vmatpush1.bf16.msra.mxu0 %v288
    %306 = vmatprep.subr.bf16.mxu0 0
    %307 = vmatpush1.bf16.msra.mxu0 %v289
    %308 = vmatprep.subr.bf16.mxu0 0
    %309 = vmatpush1.bf16.msra.mxu0 %v290
    %310 = vmatprep.subr.bf16.mxu0 0
    %311 = vmatpush1.bf16.msra.mxu0 %v291
    %312 = vmatprep.subr.bf16.mxu0 0
    %313 = vmatpush1.bf16.msra.mxu0 %v292
    %314 = vmatprep.subr.bf16.mxu0 0
    %315 = vmatpush1.bf16.msra.mxu0 %v293
    %316 = vmatprep.subr.bf16.mxu0 0
    %317 = vmatpush1.bf16.msra.mxu0 %v294
    %318 = vmatprep.subr.bf16.mxu0 0
    %319 = vmatpush1.bf16.msra.mxu0 0
    %320 = vmatprep.subr.bf16.mxu0 0
    %321 = vmatpush1.bf16.msra.mxu0 0
    %322 = vmatprep.subr.bf16.mxu0 0
    %323 = vmatpush1.bf16.msra.mxu0 0
    %324 = vmatprep.subr.bf16.mxu0 0
    %325 = vmatpush1.bf16.msra.mxu0 0
    %326 = vmatprep.subr.bf16.mxu0 0
    %327 = vmatpush1.bf16.msra.mxu0 0
    %328 = vmatprep.subr.bf16.mxu0 0
    %329 = vmatpush1.bf16.msra.mxu0 0
    %330 = vmatprep.subr.bf16.mxu0 0
    %331 = vmatpush1.bf16.msra.mxu0 0
    %332 = vmatprep.subr.bf16.mxu0 0
    %333 = vmatpush1.bf16.msra.mxu0 0
    %334 = vmatprep.mubr.bf16.mxu0 0
    %335 = vmatmul.mubr.bf16.gmra.mrb[0].mxu0 %v270
    %v336 = vpop.f32.mrb[0].mxu0
    %v337 = vadd.f32 %v300, %v336
    %v338 = vpop.f32.mrb[0].mxu0
    %v339 = vpop.f32.mrb[0].mxu0
    %v340 = vpop.f32.mrb[0].mxu0
    %341 = vdwg.mxu0
    %v342 = vtanh.pop %v337
    %v343 = vld [vmem:[%s8] sm:$0x1]
    %v344 = vld [vmem:[#allocation2] sm:$0x1]
    %346 = vset.pattern.permute.xlu0 0
    %347 = vperm.xlu0 %346, %v344
    %v348 = vpop.permute.xlu0 %347
    %v350 = vlaneseq
    %v351 = vshrl.u32 %v350, 7
    %v352 = vsub.s32 0, %v351
    %v353 = vrot.slane %v348, %v352
    %354 = vmatprep.subr.mxu0 0.0
    %355 = vmatpush1.xpose.msra.mxu0 %v342
    %356 = vmatprep.subr.mxu0 0.0
    %357 = vmatpush1.xpose.msra.mxu0 0.0
    %358 = vmatprep.subr.mxu0 0.0
    %359 = vmatpush1.xpose.msra.mxu0 0.0
    %360 = vmatprep.subr.mxu0 0.0
    %361 = vmatpush1.xpose.msra.mxu0 0.0
    %362 = vmatprep.subr.mxu0 0.0
    %363 = vmatpush1.xpose.msra.mxu0 0.0
    %364 = vmatprep.subr.mxu0 0.0
    %365 = vmatpush1.xpose.msra.mxu0 0.0
    %366 = vmatprep.subr.mxu0 0.0
    %367 = vmatpush1.xpose.msra.mxu0 0.0
    %368 = vmatprep.subr.mxu0 0.0
    %369 = vmatpush1.xpose.msra.mxu0 0.0
    %370 = vmatprep.subr.mxu0 0.0
    %371 = vmatpush1.xpose.msra.mxu0 0.0
    %372 = vmatprep.subr.mxu0 0.0
    %373 = vmatpush1.xpose.msra.mxu0 0.0
    %374 = vmatprep.subr.mxu0 0.0
    %375 = vmatpush1.xpose.msra.mxu0 0.0
    %376 = vmatprep.subr.mxu0 0.0
    %377 = vmatpush1.xpose.msra.mxu0 0.0
    %378 = vmatprep.subr.mxu0 0.0
    %379 = vmatpush1.xpose.msra.mxu0 0.0
    %380 = vmatprep.subr.mxu0 0.0
    %381 = vmatpush1.xpose.msra.mxu0 0.0
    %382 = vmatprep.subr.mxu0 0.0
    %383 = vmatpush1.xpose.msra.mxu0 0.0
    %384 = vmatprep.subr.mxu0 0.0
    %385 = vmatpush1.xpose.msra.mxu0 0.0
    %386 = vmatprep.subr.mxu0 0.0
    %387 = vmatpush1.xpose.msra.mxu0 0.0
    %388 = vmatprep.subr.mxu0 0.0
    %389 = vmatpush1.xpose.msra.mxu0 0.0
    %390 = vmatprep.subr.mxu0 0.0
    %391 = vmatpush1.xpose.msra.mxu0 0.0
    %392 = vmatprep.subr.mxu0 0.0
    %393 = vmatpush1.xpose.msra.mxu0 0.0
    %394 = vmatprep.subr.mxu0 0.0
    %395 = vmatpush1.xpose.msra.mxu0 0.0
    %396 = vmatprep.subr.mxu0 0.0
    %397 = vmatpush1.xpose.msra.mxu0 0.0
    %398 = vmatprep.subr.mxu0 0.0
    %399 = vmatpush1.xpose.msra.mxu0 0.0
    %400 = vmatprep.subr.mxu0 0.0
    %401 = vmatpush1.xpose.msra.mxu0 0.0
    %402 = vmatprep.subr.mxu0 0.0
    %403 = vmatpush1.xpose.msra.mxu0 0.0
    %404 = vmatprep.subr.mxu0 0.0
    %405 = vmatpush1.xpose.msra.mxu0 0.0
    %406 = vmatprep.subr.mxu0 0.0
    %407 = vmatpush1.xpose.msra.mxu0 0.0
    %408 = vmatprep.subr.mxu0 0.0
    %409 = vmatpush1.xpose.msra.mxu0 0.0
    %410 = vmatprep.subr.mxu0 0.0
    %411 = vmatpush1.xpose.msra.mxu0 0.0
    %412 = vmatprep.subr.mxu0 0.0
    %413 = vmatpush1.xpose.msra.mxu0 0.0
    %414 = vmatprep.subr.mxu0 0.0
    %415 = vmatpush1.xpose.msra.mxu0 0.0
    %416 = vmatprep.subr.mxu0 0.0
    %417 = vmatpush1.xpose.msra.mxu0 0.0
    %418 = vmatprep.mubr.f32.mxu0 0.0
    %419 = vmatmul.mubr.f32.gmra.mrb[0].mxu0 %v343
    %v420 = vpop.f32.mrb[0].mxu0
    %v421 = vadd.f32 %v353, %v420
    %v422 = vpop.f32.mrb[0].mxu0
    %423 = vdwg.mxu0
    %vm424 = vcmask 8192
    %425 = vst.msk [vmem:[#allocation3] sm:$0x1] %vm424, %v421
    %v426 = vld [vmem:[%s10] sm:$0x1]
    %v427 = vsub.f32 %v421, %v426
    %v428 = vmul.f32 %v427, %v427
    %v429 = vsel %vm424, %v428, 0.0
    %430 = vadd.xlane.f32.xlu0 %v429
    %v431 = vpop.xlane.xlu0 %430
    %v432 = vmul.f32 %v431, 0.5
    %vm433 = vcmask 0
    %434 = vst.msk [vmem:[#allocation5] sm:$0x1] %vm433, %v432
    // Predicated region
    $region46: #{regression_model_forward.1} parent=1 // pred_check
      _
    $region47: #{regression_model_forward.1} parent=1 // pred_check_branch
      %436 = sbr.rel (0) target = $region49
    $region48: #{regression_model_forward.1} parent=1 // pred_region
      %s438 = ssub.s32 16, 16
      %439 = vsyncadd [#allocation4], %s438
      %s441 = sshll.u32 [#allocation3], 4
      %s442 = int_to_ptr.vmem [resolvable:$true] %s441
      %444 = dma.vmem_to_hbm [thread:$0]  %s442, 16, %s11, [#allocation4]
    $region49: #{regression_model_forward.1} parent=1 // pred_fallthru
      _
    // Predicated region
    $region50: #{regression_model_forward.1} parent=1 // pred_check
      _
    $region51: #{regression_model_forward.1} parent=1 // pred_check_branch
      %446 = sbr.rel (0) target = $region53
    $region52: #{regression_model_forward.1} parent=1 // pred_region
      %s448 = ssub.s32 16, 16
      %449 = vsyncadd [#allocation6], %s448
      %s451 = sshll.u32 [#allocation5], 4
      %s452 = int_to_ptr.vmem [resolvable:$true] %s451
      %454 = dma.vmem_to_hbm [thread:$0]  %s452, 16, %s12, [#allocation6]
    $region53: #{regression_model_forward.1} parent=1 // pred_fallthru
      _
    // Predicated region
    $region54: #{regression_model_forward.1} parent=1 // pred_check
      _
    $region55: #{regression_model_forward.1} parent=1 // pred_check_branch
      %456 = sbr.rel (0) target = $region57
    $region56: #{regression_model_forward.1} parent=1 // pred_region
      %457 = dma.done [#allocation4], 16
    $region57: #{regression_model_forward.1} parent=1 // pred_fallthru
      _
    // Predicated region
    $region58: #{regression_model_forward.1} parent=1 // pred_check
      _
    $region59: #{regression_model_forward.1} parent=1 // pred_check_branch
      %459 = sbr.rel (0) target = $region61
    $region60: #{regression_model_forward.1} parent=1 // pred_region
      %460 = dma.done [#allocation6], 16
    $region61: #{regression_model_forward.1} parent=1 // pred_fallthru
      _
    %461 = vsyncpa [#allocation4], 1
    %462 = vsyncpa [#allocation6], 1

</llo_original>
